<compile_context>
chip_gen: v5e
topology: v5e:2x2
jax: 0.10.0
libtpu: 0.0.40
codegen_flags: <defaults>
</compile_context>

<pallas_src>
import functools
import math

import jax
import jax.numpy as jnp
from jax import lax
from jax.experimental import pallas as pl
from jax.experimental.pallas import tpu as pltpu

LANE = 128
SUB = 8


def _round_up(x, m):
    return ((x + m - 1) // m) * m


def _pad2(a, rows, cols):
    return jnp.pad(a, ((0, rows - a.shape[0]), (0, cols - a.shape[1])))


def _vmem_capacity_bytes():
    """Physical per-core VMEM; conservative (v7x, 64 MiB) fallback if query fails."""
    try:
        cap = int(pltpu.get_tpu_info().vmem_capacity_bytes)
    except Exception:
        cap = 64 * 1024 * 1024
    return max(cap, 32 * 1024 * 1024)


def _choose_tiling(S, Bp, I, Hp, Cp, csize, budget):
    """Pick (BT, TS, needs_mask) so the pipelined working set fits `budget` bytes."""
    bt_cap = 512 if budget >= 80 * (1 << 20) else 256
    if Bp >= 16:
        # >= 2 batch blocks so the "parallel" axis feeds both v7x TensorCores.
        bt = min(bt_cap, _round_up((Bp + 1) // 2, SUB))
    else:
        bt = Bp
    bt = min(bt, Bp)

    def pick_ts(cap):
        cap = max(1, min(cap, S))
        if S <= cap:
            return S, False
        best = 1
        for d in range(cap, 0, -1):
            if S % d == 0:
                best = d
                break
        if 2 * best >= cap:          # decent divisor of S -> no mask anywhere
            return best, False
        return cap, True             # mask only the final (padded) time chunk

    def usage(bt_, ts_):
        const_w = (2 * csize * (Hp * 2 * Hp + I * 2 * Hp + Hp * Cp)   # dbl-buffered weights
                   + 2 * 4 * (2 * Hp + Cp))                           # biases (f32)
        x_buf = 2 * csize * ts_ * bt_ * I                             # dbl-buffered x chunk
        out_buf = 2 * 4 * bt_ * Cp
        scratch = 4 * bt_ * Hp + 4 * ts_ * bt_ * 2 * Hp               # h + projected u
        return const_w + x_buf + out_buf + scratch

    ts, mask = pick_ts(32)
    while usage(bt, ts) > budget and ts > 1:     # shrink TS first ...
        ts, mask = pick_ts(ts // 2)
    while usage(bt, ts) > budget and bt > SUB:   # ... then BT
        bt = max(SUB, _round_up(bt // 2, SUB))
    return bt, ts, mask


def _rnn_fc_kernel(seq_len, ts, hp, needs_mask, unroll, cdt,
                   x_ref, pcat_ref, bcat_ref, wcat_ref, fcw_ref, fcb_ref,
                   out_ref, h_ref, u_ref):
    """Grid = (batch_tiles, time_chunks); one invocation advances h by TS steps."""
    ti = pl.program_id(1)
    last = pl.num_programs(1) - 1
    bt = h_ref.shape[0]

    @pl.when(ti == 0)
    def _():
        h_ref[...] = jnp.zeros_like(h_ref)

    # Input projection for the whole chunk: ONE (TS*BT, I) @ (I, 2Hp) GEMM
    # (bf16 inputs, f32 accumulation), result + bias kept in a VMEM scratch.
    x2d = x_ref[...].reshape(ts * bt, x_ref.shape[-1])
    u_ref[...] = (jnp.dot(x2d, pcat_ref[...], preferred_element_type=jnp.float32)
                  + bcat_ref[...])

    base_t = ti * ts

    def run_chunk(masked, h0):
        def step(s, h):
            row0 = pl.multiple_of(s * bt, bt)
            u_s = u_ref[pl.ds(row0, bt), :]                          # (BT, 2Hp) f32
            gates = u_s + jnp.dot(h.astype(cdt), wcat_ref[...],
                                  preferred_element_type=jnp.float32)
            z = jax.nn.sigmoid(gates[:, :hp])
            cand = jnp.tanh(gates[:, hp:])
            h_new = cand + z * (h - cand)                            # == z*h + (1-z)*cand
            if masked:                                               # zero-padded tail steps
                h_new = jnp.where(base_t + s < seq_len, h_new, h)
            return h_new
        return lax.fori_loop(0, ts, step, h0, unroll=unroll)

    if needs_mask:
        # Only the final time chunk can contain padded steps.
        @pl.when(ti == last)
        def _():
            h_ref[...] = run_chunk(True, h_ref[...])

        @pl.when(ti != last)
        def _():
            h_ref[...] = run_chunk(False, h_ref[...])
    else:
        h_ref[...] = run_chunk(False, h_ref[...])

    @pl.when(ti == last)
    def _():
        out_ref[...] = (jnp.dot(h_ref[...].astype(cdt), fcw_ref[...],
                                preferred_element_type=jnp.float32)
                        + fcb_ref[...]).astype(out_ref.dtype)


@functools.partial(jax.jit, static_argnames=("compute_dtype",))
def custom_rnn_forward(x, params, compute_dtype=jnp.bfloat16):
    """x: (batch, seq, input_size) f32, batch_first. Returns (batch, num_classes) f32."""
    B, S, I = x.shape
    w_z, p_z, b_z = params["w_z"], params["p_z"], params["b_z"]
    w, p, b = params["w"], params["p"], params["b"]
    fc_w, fc_b = params["fc_w"], params["fc_b"]
    H = w_z.shape[0]
    C = fc_w.shape[0]
    cdt = jnp.dtype(compute_dtype)

    if S == 0:                                  # empty sequence: h stays 0 -> fc bias only
        return jnp.broadcast_to(fc_b.astype(jnp.float32), (B, C))

    Hp = _round_up(H, LANE)
    Cp = _round_up(C, LANE)
    Bp = _round_up(max(B, SUB), SUB)

    vmem_cap = _vmem_capacity_bytes()
    vmem_limit = min(100 * (1 << 20), int(vmem_cap * 3 // 4))   # ~96 MiB on 128 MiB parts,
    budget = int(vmem_limit * 0.85)                             # ~48 MiB on v7x's 64 MiB

    BT, TS, needs_mask = _choose_tiling(S, Bp, I, Hp, Cp, cdt.itemsize, budget)
    Bp = _round_up(Bp, BT)
    Sp = _round_up(S, TS)
    n_btiles = Bp // BT
    n_tchunks = Sp // TS
    unroll = max(1, min(TS, 8))

    # Fused, lane-padded weights in the MXU compute dtype (bf16 by default):
    #   w_cat = [Wz^T | W^T], p_cat = [Pz^T | P^T], b_cat = [bz | b] (f32).
    w_cat = jnp.concatenate([_pad2(w_z.T, Hp, Hp), _pad2(w.T, Hp, Hp)], axis=1).astype(cdt)
    p_cat = jnp.concatenate([_pad2(p_z.T, I, Hp), _pad2(p.T, I, Hp)], axis=1).astype(cdt)
    b_cat = jnp.concatenate([_pad2(b_z.T, 1, Hp), _pad2(b.T, 1, Hp)], axis=1)     # f32
    fcw_p = _pad2(fc_w.T, Hp, Cp).astype(cdt)
    fcb_p = _pad2(fc_b.reshape(1, C), 1, Cp)                                      # f32

    # Time-major raw x is the only per-token HBM stream (no materialized u in HBM).
    x_tm = jnp.transpose(x, (1, 0, 2)).astype(cdt)
    x_tm = jnp.pad(x_tm, ((0, Sp - S), (0, Bp - B), (0, 0)))                      # (Sp, Bp, I)

    kernel = functools.partial(_rnn_fc_kernel, S, TS, Hp, needs_mask, unroll, cdt)

    out_p = pl.pallas_call(
        kernel,
        out_shape=jax.ShapeDtypeStruct((Bp, Cp), jnp.float32),
        grid_spec=pltpu.PrefetchScalarGridSpec(
            num_scalar_prefetch=0,
            grid=(n_btiles, n_tchunks),
            in_specs=[
                pl.BlockSpec((TS, BT, I), lambda bi, ti: (ti, bi, 0)),    # raw x chunk
                pl.BlockSpec((I, 2 * Hp), lambda bi, ti: (0, 0)),         # [Pz^T | P^T]
                pl.BlockSpec((1, 2 * Hp), lambda bi, ti: (0, 0)),         # [bz | b]
                pl.BlockSpec((Hp, 2 * Hp), lambda bi, ti: (0, 0)),        # [Wz^T | W^T]
                pl.BlockSpec((Hp, Cp), lambda bi, ti: (0, 0)),            # fc_w^T
                pl.BlockSpec((1, Cp), lambda bi, ti: (0, 0)),             # fc_b
            ],
            out_specs=pl.BlockSpec((BT, Cp), lambda bi, ti: (bi, 0)),
            scratch_shapes=[
                pltpu.VMEM((BT, Hp), jnp.float32),             # persistent hidden state
                pltpu.VMEM((TS * BT, 2 * Hp), jnp.float32),    # per-chunk projected inputs
            ],
        ),
        compiler_params=pltpu.CompilerParams(
            dimension_semantics=("parallel", "arbitrary"),
            vmem_limit_bytes=int(vmem_limit)),
    )(x_tm, p_cat, b_cat, w_cat, fcw_p, fcb_p)
    return out_p[:B, :C]


def init_params(key, input_size, hidden_size, num_classes):
    """Deterministic init mirroring the PyTorch module's shapes/distributions."""
    ks = jax.random.split(key, 8)
    bound = 1.0 / math.sqrt(hidden_size)
    u = lambda k, shape, bnd: jax.random.uniform(k, shape, jnp.float32, -bnd, bnd)
    return {
        "w_z": u(ks[0], (hidden_size, hidden_size), bound),
        "p_z": u(ks[1], (hidden_size, input_size), bound),
        "b_z": u(ks[2], (hidden_size, 1), bound),
        "w":   u(ks[3], (hidden_size, hidden_size), bound),
        "p":   u(ks[4], (hidden_size, input_size), bound),
        "b":   u(ks[5], (hidden_size, 1), bound),
        "fc_w": u(ks[6], (num_classes, hidden_size), bound),   # nn.Linear weight
        "fc_b": u(ks[7], (num_classes,), bound),               # nn.Linear bias
    }


def reference_forward(x, params):
    """Pure-JAX f32 reference matching the PyTorch semantics exactly."""
    B, S, I = x.shape
    H = params["w_z"].shape[0]
    hi = jax.lax.Precision.HIGHEST
    h = jnp.zeros((H, B), jnp.float32)          # (hidden, batch) as in the cell
    for n in range(S):
        xt = x[:, n, :].T                       # (I, B)
        z = jax.nn.sigmoid(jnp.matmul(params["w_z"], h, precision=hi)
                           + jnp.matmul(params["p_z"], xt, precision=hi) + params["b_z"])
        cand = jnp.tanh(jnp.matmul(params["w"], h, precision=hi)
                        + jnp.matmul(params["p"], xt, precision=hi) + params["b"])
        h = z * h + (1.0 - z) * cand
    return jnp.matmul(h.T, params["fc_w"].T, precision=hi) + params["fc_b"]


if __name__ == "__main__":
    key = jax.random.PRNGKey(0)
    k_param, k_x = jax.random.split(key)

    batch, seq, input_size, hidden_size, num_classes = 4, 8, 16, 32, 5
    params = init_params(k_param, input_size, hidden_size, num_classes)
    x = jax.random.normal(k_x, (batch, seq, input_size), jnp.float32)

    out = jax.block_until_ready(custom_rnn_forward(x, params))
    ref = reference_forward(x, params)

    assert out.shape == (batch, num_classes)
    assert bool(jnp.all(jnp.isfinite(out)))
    # bf16 MXU inputs with f32 accumulation over S=8 recurrent steps: tolerance is
    # set accordingly (the f32 "highest" path of the old kernel met 2e-4; passing
    # compute_dtype=jnp.float32 restores that accuracy at 3-6x MXU cost).
    assert jnp.allclose(out, ref, atol=3e-2, rtol=3e-2), (out, ref)

    print("KERNEL_OK")
</pallas_src>

<mosaic_0001>
module attributes {stable_mosaic.version = 11 : i64} {
  func.func @_rnn_fc_kernel(%arg0: i32, %arg1: i32, %arg2: memref<8x8x16xbf16, #tpu.memory_space<vmem>>, %arg3: memref<16x256xbf16, #tpu.memory_space<vmem>>, %arg4: memref<1x256xf32, #tpu.memory_space<vmem>>, %arg5: memref<128x256xbf16, #tpu.memory_space<vmem>>, %arg6: memref<128x128xbf16, #tpu.memory_space<vmem>>, %arg7: memref<1x128xf32, #tpu.memory_space<vmem>>, %arg8: memref<8x128xf32, #tpu.memory_space<vmem>>, %arg9: memref<8x128xf32, #tpu.memory_space<vmem>>, %arg10: memref<64x256xf32, #tpu.memory_space<vmem>>) attributes {dimension_semantics = [#tpu.dimension_semantics<parallel>, #tpu.dimension_semantics<arbitrary>], iteration_bounds = array<i64: 1, 1>, scalar_prefetch = 0 : i64, scratch_operands = 2 : i64, tpu.core_type = #tpu.core_type<tc>, window_params = [{transform_indices = @transform_0, window_bounds = array<i64: 8, 8, 16>}, {pipeline_mode = #tpu.pipeline_mode<synchronous>, transform_indices = @transform_1, window_bounds = array<i64: 16, 256>}, {pipeline_mode = #tpu.pipeline_mode<synchronous>, transform_indices = @transform_2, window_bounds = array<i64: 1, 256>}, {pipeline_mode = #tpu.pipeline_mode<synchronous>, transform_indices = @transform_3, window_bounds = array<i64: 128, 256>}, {pipeline_mode = #tpu.pipeline_mode<synchronous>, transform_indices = @transform_4, window_bounds = array<i64: 128, 128>}, {pipeline_mode = #tpu.pipeline_mode<synchronous>, transform_indices = @transform_5, window_bounds = array<i64: 1, 128>}, {transform_indices = @transform_6, window_bounds = array<i64: 8, 128>}]} {
    %c0_i32 = arith.constant 0 : i32
    %0 = arith.cmpi eq, %arg1, %c0_i32 : i32
    %1 = arith.extui %0 : i1 to i32
    %c0_i32_0 = arith.constant 0 : i32
    %2 = arith.cmpi ne, %1, %c0_i32_0 : i32
    scf.if %2 {
      %cst_64 = arith.constant 0.000000e+00 : f32
      %168 = vector.broadcast %cst_64 : f32 to vector<8x128xf32>
      %c0_65 = arith.constant 0 : index
      %c0_66 = arith.constant 0 : index
      %169 = vector.load %arg9[%c0_65, %c0_66] : memref<8x128xf32, #tpu.memory_space<vmem>>, vector<8x128xf32>
      tpu.vector_store %arg9[%c0_65, %c0_66], %168 {strides = array<i32>} : memref<8x128xf32, #tpu.memory_space<vmem>>, vector<8x128xf32>,
    } else {
    }
    %c0 = arith.constant 0 : index
    %c0_1 = arith.constant 0 : index
    %c0_2 = arith.constant 0 : index
    %3 = vector.load %arg2[%c0, %c0_1, %c0_2] : memref<8x8x16xbf16, #tpu.memory_space<vmem>>, vector<8x8x16xbf16>
    %4 = vector.shape_cast %3 : vector<8x8x16xbf16> to vector<64x16xbf16>
    %c0_3 = arith.constant 0 : index
    %c0_4 = arith.constant 0 : index
    %5 = vector.load %arg3[%c0_3, %c0_4] : memref<16x256xbf16, #tpu.memory_space<vmem>>, vector<16x256xbf16>
    %cst = arith.constant dense<0.000000e+00> : vector<64x256xf32>
    %6 = tpu.matmul %4, %5, %cst {dimension_numbers = #tpu.dot_dimension_numbers<[1], [0], [0], [1], [0, 0, 1, 1], [], []>} : vector<64x16xbf16>, vector<16x256xbf16>, vector<64x256xf32> -> vector<64x256xf32>
    %c0_5 = arith.constant 0 : index
    %c0_6 = arith.constant 0 : index
    %7 = vector.load %arg4[%c0_5, %c0_6] : memref<1x256xf32, #tpu.memory_space<vmem>>, vector<1x256xf32>
    %8 = vector.broadcast %7 : vector<1x256xf32> to vector<64x256xf32>
    %9 = arith.addf %6, %8 : vector<64x256xf32>
    %c0_7 = arith.constant 0 : index
    %c0_8 = arith.constant 0 : index
    %10 = vector.load %arg10[%c0_7, %c0_8] : memref<64x256xf32, #tpu.memory_space<vmem>>, vector<64x256xf32>
    tpu.vector_store %arg10[%c0_7, %c0_8], %9 {strides = array<i32>} : memref<64x256xf32, #tpu.memory_space<vmem>>, vector<64x256xf32>,
    %c0_9 = arith.constant 0 : index
    %c0_10 = arith.constant 0 : index
    %11 = vector.load %arg9[%c0_9, %c0_10] : memref<8x128xf32, #tpu.memory_space<vmem>>, vector<8x128xf32>
    %c0_i32_11 = arith.constant 0 : i32
    %c8_i32 = arith.constant 8 : i32
    %12 = arith.muli %c0_i32_11, %c8_i32 : i32
    %13 = tpu.assume_multiple %12, 8 : i32
    %14 = arith.index_cast %13 : i32 to index
    %c0_12 = arith.constant 0 : index
    %15 = vector.load %arg10[%14, %c0_12] : memref<64x256xf32, #tpu.memory_space<vmem>>, vector<8x256xf32>
    %16 = arith.truncf %11 : vector<8x128xf32> to vector<8x128xbf16>
    %c0_13 = arith.constant 0 : index
    %c0_14 = arith.constant 0 : index
    %17 = vector.load %arg5[%c0_13, %c0_14] : memref<128x256xbf16, #tpu.memory_space<vmem>>, vector<128x256xbf16>
    %cst_15 = arith.constant dense<0.000000e+00> : vector<8x256xf32>
    %18 = tpu.matmul %16, %17, %cst_15 {dimension_numbers = #tpu.dot_dimension_numbers<[1], [0], [0], [1], [0, 0, 1, 1], [], []>} : vector<8x128xbf16>, vector<128x256xbf16>, vector<8x256xf32> -> vector<8x256xf32>
    %19 = arith.addf %15, %18 : vector<8x256xf32>
    %20 = vector.extract_strided_slice %19 {offsets = [0, 0], sizes = [8, 128], strides = [1, 1]} : vector<8x256xf32> to vector<8x128xf32>
    %21 = arith.negf %20 : vector<8x128xf32>
    %22 = math.exp %21 : vector<8x128xf32>
    %cst_16 = arith.constant 1.000000e+00 : f32
    %23 = vector.broadcast %cst_16 : f32 to vector<8x128xf32>
    %24 = arith.addf %23, %22 : vector<8x128xf32>
    %25 = arith.divf %23, %24 : vector<8x128xf32>
    %26 = vector.extract_strided_slice %19 {offsets = [0, 128], sizes = [8, 128], strides = [1, 1]} : vector<8x256xf32> to vector<8x128xf32>
    %27 = math.tanh %26 : vector<8x128xf32>
    %28 = arith.subf %11, %27 : vector<8x128xf32>
    %29 = arith.mulf %25, %28 : vector<8x128xf32>
    %30 = arith.addf %27, %29 : vector<8x128xf32>
    %c1_i32 = arith.constant 1 : i32
    %c8_i32_17 = arith.constant 8 : i32
    %31 = arith.muli %c1_i32, %c8_i32_17 : i32
    %32 = tpu.assume_multiple %31, 8 : i32
    %33 = arith.index_cast %32 : i32 to index
    %c0_18 = arith.constant 0 : index
    %34 = vector.load %arg10[%33, %c0_18] : memref<64x256xf32, #tpu.memory_space<vmem>>, vector<8x256xf32>
    %35 = arith.truncf %30 : vector<8x128xf32> to vector<8x128xbf16>
    %c0_19 = arith.constant 0 : index
    %c0_20 = arith.constant 0 : index
    %36 = vector.load %arg5[%c0_19, %c0_20] : memref<128x256xbf16, #tpu.memory_space<vmem>>, vector<128x256xbf16>
    %cst_21 = arith.constant dense<0.000000e+00> : vector<8x256xf32>
    %37 = tpu.matmul %35, %36, %cst_21 {dimension_numbers = #tpu.dot_dimension_numbers<[1], [0], [0], [1], [0, 0, 1, 1], [], []>} : vector<8x128xbf16>, vector<128x256xbf16>, vector<8x256xf32> -> vector<8x256xf32>
    %38 = arith.addf %34, %37 : vector<8x256xf32>
    %39 = vector.extract_strided_slice %38 {offsets = [0, 0], sizes = [8, 128], strides = [1, 1]} : vector<8x256xf32> to vector<8x128xf32>
    %40 = arith.negf %39 : vector<8x128xf32>
    %41 = math.exp %40 : vector<8x128xf32>
    %cst_22 = arith.constant 1.000000e+00 : f32
    %42 = vector.broadcast %cst_22 : f32 to vector<8x128xf32>
    %43 = arith.addf %42, %41 : vector<8x128xf32>
    %44 = arith.divf %42, %43 : vector<8x128xf32>
    %45 = vector.extract_strided_slice %38 {offsets = [0, 128], sizes = [8, 128], strides = [1, 1]} : vector<8x256xf32> to vector<8x128xf32>
    %46 = math.tanh %45 : vector<8x128xf32>
    %47 = arith.subf %30, %46 : vector<8x128xf32>
    %48 = arith.mulf %44, %47 : vector<8x128xf32>
    %49 = arith.addf %46, %48 : vector<8x128xf32>
    %c2_i32 = arith.constant 2 : i32
    %c8_i32_23 = arith.constant 8 : i32
    %50 = arith.muli %c2_i32, %c8_i32_23 : i32
    %51 = tpu.assume_multiple %50, 8 : i32
    %52 = arith.index_cast %51 : i32 to index
    %c0_24 = arith.constant 0 : index
    %53 = vector.load %arg10[%52, %c0_24] : memref<64x256xf32, #tpu.memory_space<vmem>>, vector<8x256xf32>
    %54 = arith.truncf %49 : vector<8x128xf32> to vector<8x128xbf16>
    %c0_25 = arith.constant 0 : index
    %c0_26 = arith.constant 0 : index
    %55 = vector.load %arg5[%c0_25, %c0_26] : memref<128x256xbf16, #tpu.memory_space<vmem>>, vector<128x256xbf16>
    %cst_27 = arith.constant dense<0.000000e+00> : vector<8x256xf32>
    %56 = tpu.matmul %54, %55, %cst_27 {dimension_numbers = #tpu.dot_dimension_numbers<[1], [0], [0], [1], [0, 0, 1, 1], [], []>} : vector<8x128xbf16>, vector<128x256xbf16>, vector<8x256xf32> -> vector<8x256xf32>
    %57 = arith.addf %53, %56 : vector<8x256xf32>
    %58 = vector.extract_strided_slice %57 {offsets = [0, 0], sizes = [8, 128], strides = [1, 1]} : vector<8x256xf32> to vector<8x128xf32>
    %59 = arith.negf %58 : vector<8x128xf32>
    %60 = math.exp %59 : vector<8x128xf32>
    %cst_28 = arith.constant 1.000000e+00 : f32
    %61 = vector.broadcast %cst_28 : f32 to vector<8x128xf32>
    %62 = arith.addf %61, %60 : vector<8x128xf32>
    %63 = arith.divf %61, %62 : vector<8x128xf32>
    %64 = vector.extract_strided_slice %57 {offsets = [0, 128], sizes = [8, 128], strides = [1, 1]} : vector<8x256xf32> to vector<8x128xf32>
    %65 = math.tanh %64 : vector<8x128xf32>
    %66 = arith.subf %49, %65 : vector<8x128xf32>
    %67 = arith.mulf %63, %66 : vector<8x128xf32>
    %68 = arith.addf %65, %67 : vector<8x128xf32>
    %c3_i32 = arith.constant 3 : i32
    %c8_i32_29 = arith.constant 8 : i32
    %69 = arith.muli %c3_i32, %c8_i32_29 : i32
    %70 = tpu.assume_multiple %69, 8 : i32
    %71 = arith.index_cast %70 : i32 to index
    %c0_30 = arith.constant 0 : index
    %72 = vector.load %arg10[%71, %c0_30] : memref<64x256xf32, #tpu.memory_space<vmem>>, vector<8x256xf32>
    %73 = arith.truncf %68 : vector<8x128xf32> to vector<8x128xbf16>
    %c0_31 = arith.constant 0 : index
    %c0_32 = arith.constant 0 : index
    %74 = vector.load %arg5[%c0_31, %c0_32] : memref<128x256xbf16, #tpu.memory_space<vmem>>, vector<128x256xbf16>
    %cst_33 = arith.constant dense<0.000000e+00> : vector<8x256xf32>
    %75 = tpu.matmul %73, %74, %cst_33 {dimension_numbers = #tpu.dot_dimension_numbers<[1], [0], [0], [1], [0, 0, 1, 1], [], []>} : vector<8x128xbf16>, vector<128x256xbf16>, vector<8x256xf32> -> vector<8x256xf32>
    %76 = arith.addf %72, %75 : vector<8x256xf32>
    %77 = vector.extract_strided_slice %76 {offsets = [0, 0], sizes = [8, 128], strides = [1, 1]} : vector<8x256xf32> to vector<8x128xf32>
    %78 = arith.negf %77 : vector<8x128xf32>
    %79 = math.exp %78 : vector<8x128xf32>
    %cst_34 = arith.constant 1.000000e+00 : f32
    %80 = vector.broadcast %cst_34 : f32 to vector<8x128xf32>
    %81 = arith.addf %80, %79 : vector<8x128xf32>
    %82 = arith.divf %80, %81 : vector<8x128xf32>
    %83 = vector.extract_strided_slice %76 {offsets = [0, 128], sizes = [8, 128], strides = [1, 1]} : vector<8x256xf32> to vector<8x128xf32>
    %84 = math.tanh %83 : vector<8x128xf32>
    %85 = arith.subf %68, %84 : vector<8x128xf32>
    %86 = arith.mulf %82, %85 : vector<8x128xf32>
    %87 = arith.addf %84, %86 : vector<8x128xf32>
    %c4_i32 = arith.constant 4 : i32
    %c8_i32_35 = arith.constant 8 : i32
    %88 = arith.muli %c4_i32, %c8_i32_35 : i32
    %89 = tpu.assume_multiple %88, 8 : i32
    %90 = arith.index_cast %89 : i32 to index
    %c0_36 = arith.constant 0 : index
    %91 = vector.load %arg10[%90, %c0_36] : memref<64x256xf32, #tpu.memory_space<vmem>>, vector<8x256xf32>
    %92 = arith.truncf %87 : vector<8x128xf32> to vector<8x128xbf16>
    %c0_37 = arith.constant 0 : index
    %c0_38 = arith.constant 0 : index
    %93 = vector.load %arg5[%c0_37, %c0_38] : memref<128x256xbf16, #tpu.memory_space<vmem>>, vector<128x256xbf16>
    %cst_39 = arith.constant dense<0.000000e+00> : vector<8x256xf32>
    %94 = tpu.matmul %92, %93, %cst_39 {dimension_numbers = #tpu.dot_dimension_numbers<[1], [0], [0], [1], [0, 0, 1, 1], [], []>} : vector<8x128xbf16>, vector<128x256xbf16>, vector<8x256xf32> -> vector<8x256xf32>
    %95 = arith.addf %91, %94 : vector<8x256xf32>
    %96 = vector.extract_strided_slice %95 {offsets = [0, 0], sizes = [8, 128], strides = [1, 1]} : vector<8x256xf32> to vector<8x128xf32>
    %97 = arith.negf %96 : vector<8x128xf32>
    %98 = math.exp %97 : vector<8x128xf32>
    %cst_40 = arith.constant 1.000000e+00 : f32
    %99 = vector.broadcast %cst_40 : f32 to vector<8x128xf32>
    %100 = arith.addf %99, %98 : vector<8x128xf32>
    %101 = arith.divf %99, %100 : vector<8x128xf32>
    %102 = vector.extract_strided_slice %95 {offsets = [0, 128], sizes = [8, 128], strides = [1, 1]} : vector<8x256xf32> to vector<8x128xf32>
    %103 = math.tanh %102 : vector<8x128xf32>
    %104 = arith.subf %87, %103 : vector<8x128xf32>
    %105 = arith.mulf %101, %104 : vector<8x128xf32>
    %106 = arith.addf %103, %105 : vector<8x128xf32>
    %c5_i32 = arith.constant 5 : i32
    %c8_i32_41 = arith.constant 8 : i32
    %107 = arith.muli %c5_i32, %c8_i32_41 : i32
    %108 = tpu.assume_multiple %107, 8 : i32
    %109 = arith.index_cast %108 : i32 to index
    %c0_42 = arith.constant 0 : index
    %110 = vector.load %arg10[%109, %c0_42] : memref<64x256xf32, #tpu.memory_space<vmem>>, vector<8x256xf32>
    %111 = arith.truncf %106 : vector<8x128xf32> to vector<8x128xbf16>
    %c0_43 = arith.constant 0 : index
    %c0_44 = arith.constant 0 : index
    %112 = vector.load %arg5[%c0_43, %c0_44] : memref<128x256xbf16, #tpu.memory_space<vmem>>, vector<128x256xbf16>
    %cst_45 = arith.constant dense<0.000000e+00> : vector<8x256xf32>
    %113 = tpu.matmul %111, %112, %cst_45 {dimension_numbers = #tpu.dot_dimension_numbers<[1], [0], [0], [1], [0, 0, 1, 1], [], []>} : vector<8x128xbf16>, vector<128x256xbf16>, vector<8x256xf32> -> vector<8x256xf32>
    %114 = arith.addf %110, %113 : vector<8x256xf32>
    %115 = vector.extract_strided_slice %114 {offsets = [0, 0], sizes = [8, 128], strides = [1, 1]} : vector<8x256xf32> to vector<8x128xf32>
    %116 = arith.negf %115 : vector<8x128xf32>
    %117 = math.exp %116 : vector<8x128xf32>
    %cst_46 = arith.constant 1.000000e+00 : f32
    %118 = vector.broadcast %cst_46 : f32 to vector<8x128xf32>
    %119 = arith.addf %118, %117 : vector<8x128xf32>
    %120 = arith.divf %118, %119 : vector<8x128xf32>
    %121 = vector.extract_strided_slice %114 {offsets = [0, 128], sizes = [8, 128], strides = [1, 1]} : vector<8x256xf32> to vector<8x128xf32>
    %122 = math.tanh %121 : vector<8x128xf32>
    %123 = arith.subf %106, %122 : vector<8x128xf32>
    %124 = arith.mulf %120, %123 : vector<8x128xf32>
    %125 = arith.addf %122, %124 : vector<8x128xf32>
    %c6_i32 = arith.constant 6 : i32
    %c8_i32_47 = arith.constant 8 : i32
    %126 = arith.muli %c6_i32, %c8_i32_47 : i32
    %127 = tpu.assume_multiple %126, 8 : i32
    %128 = arith.index_cast %127 : i32 to index
    %c0_48 = arith.constant 0 : index
    %129 = vector.load %arg10[%128, %c0_48] : memref<64x256xf32, #tpu.memory_space<vmem>>, vector<8x256xf32>
    %130 = arith.truncf %125 : vector<8x128xf32> to vector<8x128xbf16>
    %c0_49 = arith.constant 0 : index
    %c0_50 = arith.constant 0 : index
    %131 = vector.load %arg5[%c0_49, %c0_50] : memref<128x256xbf16, #tpu.memory_space<vmem>>, vector<128x256xbf16>
    %cst_51 = arith.constant dense<0.000000e+00> : vector<8x256xf32>
    %132 = tpu.matmul %130, %131, %cst_51 {dimension_numbers = #tpu.dot_dimension_numbers<[1], [0], [0], [1], [0, 0, 1, 1], [], []>} : vector<8x128xbf16>, vector<128x256xbf16>, vector<8x256xf32> -> vector<8x256xf32>
    %133 = arith.addf %129, %132 : vector<8x256xf32>
    %134 = vector.extract_strided_slice %133 {offsets = [0, 0], sizes = [8, 128], strides = [1, 1]} : vector<8x256xf32> to vector<8x128xf32>
    %135 = arith.negf %134 : vector<8x128xf32>
    %136 = math.exp %135 : vector<8x128xf32>
    %cst_52 = arith.constant 1.000000e+00 : f32
    %137 = vector.broadcast %cst_52 : f32 to vector<8x128xf32>
    %138 = arith.addf %137, %136 : vector<8x128xf32>
    %139 = arith.divf %137, %138 : vector<8x128xf32>
    %140 = vector.extract_strided_slice %133 {offsets = [0, 128], sizes = [8, 128], strides = [1, 1]} : vector<8x256xf32> to vector<8x128xf32>
    %141 = math.tanh %140 : vector<8x128xf32>
    %142 = arith.subf %125, %141 : vector<8x128xf32>
    %143 = arith.mulf %139, %142 : vector<8x128xf32>
    %144 = arith.addf %141, %143 : vector<8x128xf32>
    %c7_i32 = arith.constant 7 : i32
    %c8_i32_53 = arith.constant 8 : i32
    %145 = arith.muli %c7_i32, %c8_i32_53 : i32
    %146 = tpu.assume_multiple %145, 8 : i32
    %147 = arith.index_cast %146 : i32 to index
    %c0_54 = arith.constant 0 : index
    %148 = vector.load %arg10[%147, %c0_54] : memref<64x256xf32, #tpu.memory_space<vmem>>, vector<8x256xf32>
    %149 = arith.truncf %144 : vector<8x128xf32> to vector<8x128xbf16>
    %c0_55 = arith.constant 0 : index
    %c0_56 = arith.constant 0 : index
    %150 = vector.load %arg5[%c0_55, %c0_56] : memref<128x256xbf16, #tpu.memory_space<vmem>>, vector<128x256xbf16>
    %cst_57 = arith.constant dense<0.000000e+00> : vector<8x256xf32>
    %151 = tpu.matmul %149, %150, %cst_57 {dimension_numbers = #tpu.dot_dimension_numbers<[1], [0], [0], [1], [0, 0, 1, 1], [], []>} : vector<8x128xbf16>, vector<128x256xbf16>, vector<8x256xf32> -> vector<8x256xf32>
    %152 = arith.addf %148, %151 : vector<8x256xf32>
    %153 = vector.extract_strided_slice %152 {offsets = [0, 0], sizes = [8, 128], strides = [1, 1]} : vector<8x256xf32> to vector<8x128xf32>
    %154 = arith.negf %153 : vector<8x128xf32>
    %155 = math.exp %154 : vector<8x128xf32>
    %cst_58 = arith.constant 1.000000e+00 : f32
    %156 = vector.broadcast %cst_58 : f32 to vector<8x128xf32>
    %157 = arith.addf %156, %155 : vector<8x128xf32>
    %158 = arith.divf %156, %157 : vector<8x128xf32>
    %159 = vector.extract_strided_slice %152 {offsets = [0, 128], sizes = [8, 128], strides = [1, 1]} : vector<8x256xf32> to vector<8x128xf32>
    %160 = math.tanh %159 : vector<8x128xf32>
    %161 = arith.subf %144, %160 : vector<8x128xf32>
    %162 = arith.mulf %158, %161 : vector<8x128xf32>
    %163 = arith.addf %160, %162 : vector<8x128xf32>
    %c8_i32_59 = arith.constant 8 : i32
    %c0_60 = arith.constant 0 : index
    %c0_61 = arith.constant 0 : index
    %164 = vector.load %arg9[%c0_60, %c0_61] : memref<8x128xf32, #tpu.memory_space<vmem>>, vector<8x128xf32>
    tpu.vector_store %arg9[%c0_60, %c0_61], %163 {strides = array<i32>} : memref<8x128xf32, #tpu.memory_space<vmem>>, vector<8x128xf32>,
    %c0_i32_62 = arith.constant 0 : i32
    %165 = arith.cmpi eq, %arg1, %c0_i32_62 : i32
    %166 = arith.extui %165 : i1 to i32
    %c0_i32_63 = arith.constant 0 : i32
    %167 = arith.cmpi ne, %166, %c0_i32_63 : i32
    scf.if %167 {
      %c0_64 = arith.constant 0 : index
      %c0_65 = arith.constant 0 : index
      %168 = vector.load %arg9[%c0_64, %c0_65] : memref<8x128xf32, #tpu.memory_space<vmem>>, vector<8x128xf32>
      %169 = arith.truncf %168 : vector<8x128xf32> to vector<8x128xbf16>
      %c0_66 = arith.constant 0 : index
      %c0_67 = arith.constant 0 : index
      %170 = vector.load %arg6[%c0_66, %c0_67] : memref<128x128xbf16, #tpu.memory_space<vmem>>, vector<128x128xbf16>
      %cst_68 = arith.constant dense<0.000000e+00> : vector<8x128xf32>
      %171 = tpu.matmul %169, %170, %cst_68 {dimension_numbers = #tpu.dot_dimension_numbers<[1], [0], [0], [1], [0, 0, 1, 1], [], []>} : vector<8x128xbf16>, vector<128x128xbf16>, vector<8x128xf32> -> vector<8x128xf32>
      %c0_69 = arith.constant 0 : index
      %c0_70 = arith.constant 0 : index
      %172 = vector.load %arg7[%c0_69, %c0_70] : memref<1x128xf32, #tpu.memory_space<vmem>>, vector<1x128xf32>
      %173 = vector.broadcast %172 : vector<1x128xf32> to vector<8x128xf32>
      %174 = arith.addf %171, %173 : vector<8x128xf32>
      %c0_71 = arith.constant 0 : index
      %c0_72 = arith.constant 0 : index
      %175 = vector.load %arg8[%c0_71, %c0_72] : memref<8x128xf32, #tpu.memory_space<vmem>>, vector<8x128xf32>
      tpu.vector_store %arg8[%c0_71, %c0_72], %174 {strides = array<i32>} : memref<8x128xf32, #tpu.memory_space<vmem>>, vector<8x128xf32>,
    } else {
    }
    return
  }
  func.func @transform_0(%arg0: i32, %arg1: i32) -> (i32, i32, i32) {
    %c0_i32 = arith.constant 0 : i32
    %c0_i32_0 = arith.constant 0 : i32
    return %arg1, %arg0, %c0_i32 : i32, i32, i32
  }
  func.func @transform_1(%arg0: i32, %arg1: i32) -> (i32, i32) {
    %c0_i32 = arith.constant 0 : i32
    %c0_i32_0 = arith.constant 0 : i32
    %c0_i32_1 = arith.constant 0 : i32
    return %c0_i32, %c0_i32_0 : i32, i32
  }
  func.func @transform_2(%arg0: i32, %arg1: i32) -> (i32, i32) {
    %c0_i32 = arith.constant 0 : i32
    %c0_i32_0 = arith.constant 0 : i32
    %c0_i32_1 = arith.constant 0 : i32
    return %c0_i32, %c0_i32_0 : i32, i32
  }
  func.func @transform_3(%arg0: i32, %arg1: i32) -> (i32, i32) {
    %c0_i32 = arith.constant 0 : i32
    %c0_i32_0 = arith.constant 0 : i32
    %c0_i32_1 = arith.constant 0 : i32
    return %c0_i32, %c0_i32_0 : i32, i32
  }
  func.func @transform_4(%arg0: i32, %arg1: i32) -> (i32, i32) {
    %c0_i32 = arith.constant 0 : i32
    %c0_i32_0 = arith.constant 0 : i32
    %c0_i32_1 = arith.constant 0 : i32
    return %c0_i32, %c0_i32_0 : i32, i32
  }
  func.func @transform_5(%arg0: i32, %arg1: i32) -> (i32, i32) {
    %c0_i32 = arith.constant 0 : i32
    %c0_i32_0 = arith.constant 0 : i32
    %c0_i32_1 = arith.constant 0 : i32
    return %c0_i32, %c0_i32_0 : i32, i32
  }
  func.func @transform_6(%arg0: i32, %arg1: i32) -> (i32, i32) {
    %c0_i32 = arith.constant 0 : i32
    %c0_i32_0 = arith.constant 0 : i32
    return %arg0, %c0_i32 : i32, i32
  }
}

</mosaic_0001>

<llo_original>
// kernel: custom_rnn_forward.1
$region0: #{custom_rnn_forward.1}
  #allocation0 [shape = 'u32[]', space=smem, size = 0x4, offset = 0x4, fixed_abs, tag = 'smem constant byte address 0x4 - core index']
  #allocation1 [shape = 'u32[72,128]{1,0:T(1,128)}', space=vmem, size = 0x9000, scoped, tag = 'internal scratch']
  #allocation2 [shape = 'f32[8,128]{1,0:T(8,128)}', space=vmem, size = 0x1000, scoped, tag = 'scratch operand']
  #allocation3 [shape = 'f32[64,256]{1,0:T(8,128)}', space=vmem, size = 0x10000, scoped, tag = 'scratch operand']
  %s0 = inlined_call_operand.vmem [shape: bf16[8,8,16], index: 0, kind: input, shape index: {}]
  %s1 = inlined_call_operand.vmem [shape: bf16[16,256], index: 1, kind: input, shape index: {}]
  %s2 = inlined_call_operand.vmem [shape: f32[1,256], index: 2, kind: input, shape index: {}]
  %s3 = inlined_call_operand.vmem [shape: bf16[128,256], index: 3, kind: input, shape index: {}]
  %s4 = inlined_call_operand.vmem [shape: bf16[128,128], index: 4, kind: input, shape index: {}]
  %s5 = inlined_call_operand.vmem [shape: f32[1,128], index: 5, kind: input, shape index: {}]
  %s6 = inlined_call_operand.vmem [shape: f32[8,128], index: 6, kind: output, shape index: {}]
  %s7 = sld [smem:[#allocation0]]
  $region42: #{custom_rnn_forward.1} parent=0
    _
  %s9 = ssub.s32 1, %s7
  %s10 = scalar_select 0, %s9, %s7
  // Predicated region
  $region2: #{custom_rnn_forward.1} parent=0 // pred_check
    _
  $region3: #{custom_rnn_forward.1} parent=0 // pred_check_branch
    %12 = sbr.rel (0) target = $region5
  $region4: #{custom_rnn_forward.1} parent=0 // pred_region
    _
  $region5: #{custom_rnn_forward.1} parent=0 // pred_fallthru
    _
  // Predicated region
  $region6: #{custom_rnn_forward.1} parent=0 // pred_check
    _
  $region7: #{custom_rnn_forward.1} parent=0 // pred_check_branch
    %14 = sbr.rel (0) target = $region9
  $region8: #{custom_rnn_forward.1} parent=0 // pred_region
    _
  $region9: #{custom_rnn_forward.1} parent=0 // pred_fallthru
    _
  // Predicated region
  $region10: #{custom_rnn_forward.1} parent=0 // pred_check
    _
  $region11: #{custom_rnn_forward.1} parent=0 // pred_check_branch
    %16 = sbr.rel (0) target = $region13
  $region12: #{custom_rnn_forward.1} parent=0 // pred_region
    _
  $region13: #{custom_rnn_forward.1} parent=0 // pred_fallthru
    _
  // Predicated region
  $region14: #{custom_rnn_forward.1} parent=0 // pred_check
    _
  $region15: #{custom_rnn_forward.1} parent=0 // pred_check_branch
    %18 = sbr.rel (0) target = $region17
  $region16: #{custom_rnn_forward.1} parent=0 // pred_region
    _
  $region17: #{custom_rnn_forward.1} parent=0 // pred_fallthru
    _
  // Predicated region
  $region18: #{custom_rnn_forward.1} parent=0 // pred_check
    _
  $region19: #{custom_rnn_forward.1} parent=0 // pred_check_branch
    %20 = sbr.rel (0) target = $region21
  $region20: #{custom_rnn_forward.1} parent=0 // pred_region
    _
  $region21: #{custom_rnn_forward.1} parent=0 // pred_fallthru
    _
  // Predicated region
  $region22: #{custom_rnn_forward.1} parent=0 // pred_check
    _
  $region23: #{custom_rnn_forward.1} parent=0 // pred_check_branch
    %22 = sbr.rel (0) target = $region25
  $region24: #{custom_rnn_forward.1} parent=0 // pred_region
    _
  $region25: #{custom_rnn_forward.1} parent=0 // pred_fallthru
    _
  %p24 = scmp.eq.s32.totalorder 0, 0
  // Predicated region
  $region26: #{custom_rnn_forward.1} parent=0 // pred_check
    %p25 = pneg %p24
  $region27: #{custom_rnn_forward.1} parent=0 // pred_check_branch
    %27 = sbr.rel (%p25) target = $region29
  $region28: #{custom_rnn_forward.1} parent=0 // pred_region
    %28 = vst [vmem:[#allocation2] sm:$0xff] 0.0
  $region29: #{custom_rnn_forward.1} parent=0 // pred_fallthru
    _
  %v29 = vld [vmem:[%s0] sm:$0xf]
  %v30 = vld [vmem:[%s0 + $0x4] sm:$0xf]
  %v31 = vld [vmem:[%s0 + $0x8] sm:$0xf]
  %v32 = vld [vmem:[%s0 + $0xc] sm:$0xf]
  %v33 = vld [vmem:[%s0 + $0x10] sm:$0xf]
  %v34 = vld [vmem:[%s0 + $0x14] sm:$0xf]
  %v35 = vld [vmem:[%s0 + $0x18] sm:$0xf]
  %v36 = vld [vmem:[%s0 + $0x1c] sm:$0xf]
  %v37 = vld [vmem:[%s1] sm:$0xff]
  %v38 = vld [vmem:[%s1 + $0x8] sm:$0xff]
  %v39 = vld [vmem:[%s2] sm:$0x3]
  %v41 = vperm.slane %v39, 0
  %v42 = vperm.slane %v39, 1
  %v53 = vunpack.c.l.b16 %v29
  %v54 = vunpack.c.l.b16 %v30
  %v55 = vunpack.c.l.b16 %v31
  %v56 = vunpack.c.l.b16 %v32
  %v57 = vunpack.c.l.b16 %v33
  %v58 = vunpack.c.l.b16 %v34
  %v59 = vunpack.c.l.b16 %v35
  %v60 = vunpack.c.l.b16 %v36
  %v61 = vpack.c.b16 %v54, %v53
  %v62 = vpack.c.b16 %v56, %v55
  %v63 = vpack.c.b16 %v58, %v57
  %v64 = vpack.c.b16 %v60, %v59
  %v67 = vunpack.c.l.b16 %v37
  %v68 = vunpack.c.h.b16 %v37
  %v69 = vunpack.c.l.b16 %v38
  %v70 = vunpack.c.h.b16 %v38
  %v71 = vpack.c.b16 %v69, %v67
  %v72 = vpack.c.b16 %v70, %v68
  %vm75 = vcmask 130048
  %v77 = vsel %vm75, %v61, 0
  %v80 = vsel %vm75, %v62, 0
  %v83 = vsel %vm75, %v63, 0
  %v86 = vsel %vm75, %v64, 0
  %88 = vmatpush.bf16.msra.mxu0 0
  %89 = vmatpush.bf16.msra.mxu0 0
  %90 = vmatpush.bf16.msra.mxu0 0
  %91 = vmatpush.bf16.msra.mxu0 0
  %92 = vmatpush.bf16.msra.mxu0 0
  %93 = vmatpush.bf16.msra.mxu0 0
  %94 = vmatpush.bf16.msra.mxu0 0
  %95 = vmatpush.bf16.msra.mxu0 %v71
  %96 = vmatmul.bf16.gmra.mxu0 %v77
  %v97 = vpop.f32.mrf.mxu0
  %v98 = vadd.f32 %v41, %v97
  %v99 = vpop.f32.mrf.mxu0
  %v100 = vadd.f32 %v41, %v99
  %101 = vmatmul.bf16.gmra.mxu0 %v80
  %v102 = vpop.f32.mrf.mxu0
  %v103 = vadd.f32 %v41, %v102
  %v104 = vpop.f32.mrf.mxu0
  %v105 = vadd.f32 %v41, %v104
  %106 = vmatmul.bf16.gmra.mxu0 %v83
  %v107 = vpop.f32.mrf.mxu0
  %v108 = vadd.f32 %v41, %v107
  %v109 = vpop.f32.mrf.mxu0
  %v110 = vadd.f32 %v41, %v109
  %111 = vmatmul.bf16.gmra.mxu0 %v86
  %v112 = vpop.f32.mrf.mxu0
  %v113 = vadd.f32 %v41, %v112
  %v114 = vpop.f32.mrf.mxu0
  %v115 = vadd.f32 %v41, %v114
  %116 = vdwg.mxu0
  %117 = vmatpush.bf16.msra.mxu0 0
  %118 = vmatpush.bf16.msra.mxu0 0
  %119 = vmatpush.bf16.msra.mxu0 0
  %120 = vmatpush.bf16.msra.mxu0 0
  %121 = vmatpush.bf16.msra.mxu0 0
  %122 = vmatpush.bf16.msra.mxu0 0
  %123 = vmatpush.bf16.msra.mxu0 0
  %124 = vmatpush.bf16.msra.mxu0 %v72
  %125 = vmatmul.bf16.gmra.mxu0 %v77
  %v126 = vpop.f32.mrf.mxu0
  %v127 = vadd.f32 %v42, %v126
  %v128 = vpop.f32.mrf.mxu0
  %v129 = vadd.f32 %v42, %v128
  %130 = vmatmul.bf16.gmra.mxu0 %v80
  %v131 = vpop.f32.mrf.mxu0
  %v132 = vadd.f32 %v42, %v131
  %v133 = vpop.f32.mrf.mxu0
  %v134 = vadd.f32 %v42, %v133
  %135 = vmatmul.bf16.gmra.mxu0 %v83
  %v136 = vpop.f32.mrf.mxu0
  %v137 = vadd.f32 %v42, %v136
  %v138 = vpop.f32.mrf.mxu0
  %v139 = vadd.f32 %v42, %v138
  %140 = vmatmul.bf16.gmra.mxu0 %v86
  %v141 = vpop.f32.mrf.mxu0
  %v142 = vadd.f32 %v42, %v141
  %v143 = vpop.f32.mrf.mxu0
  %v144 = vadd.f32 %v42, %v143
  %145 = vdwg.mxu0
  %146 = vst [vmem:[#allocation3] sm:$0xff] %v98
  %147 = vst [vmem:[#allocation3 + $0x8] sm:$0xff] %v127
  %148 = vst [vmem:[#allocation3 + $0x10] sm:$0xff] %v100
  %149 = vst [vmem:[#allocation3 + $0x18] sm:$0xff] %v129
  %150 = vst [vmem:[#allocation3 + $0x20] sm:$0xff] %v103
  %151 = vst [vmem:[#allocation3 + $0x28] sm:$0xff] %v132
  %152 = vst [vmem:[#allocation3 + $0x30] sm:$0xff] %v105
  %153 = vst [vmem:[#allocation3 + $0x38] sm:$0xff] %v134
  %154 = vst [vmem:[#allocation3 + $0x40] sm:$0xff] %v108
  %155 = vst [vmem:[#allocation3 + $0x48] sm:$0xff] %v137
  %156 = vst [vmem:[#allocation3 + $0x50] sm:$0xff] %v110
  %157 = vst [vmem:[#allocation3 + $0x58] sm:$0xff] %v139
  %158 = vst [vmem:[#allocation3 + $0x60] sm:$0xff] %v113
  %159 = vst [vmem:[#allocation3 + $0x68] sm:$0xff] %v142
  %160 = vst [vmem:[#allocation3 + $0x70] sm:$0xff] %v115
  %161 = vst [vmem:[#allocation3 + $0x78] sm:$0xff] %v144
  %v162 = vld [vmem:[#allocation2] sm:$0xff]
  %s163 = smul.u32 0, 2
  %s164 = smul.addr %s163, 8
  %s165 = scalar_lea.vmem [#allocation3], %s164
  %v166 = vld [vmem:[%s165] sm:$0xff]
  %v167 = vld [vmem:[%s165 + $0x8] sm:$0xff]
  %v168 = vpack.c.bf16 %v162, %v162
  %v169 = vld [vmem:[%s3] sm:$0xff]
  %v170 = vld [vmem:[%s3 + $0x8] sm:$0xff]
  %v171 = vld [vmem:[%s3 + $0x10] sm:$0xff]
  %v172 = vld [vmem:[%s3 + $0x18] sm:$0xff]
  %v173 = vld [vmem:[%s3 + $0x20] sm:$0xff]
  %v174 = vld [vmem:[%s3 + $0x28] sm:$0xff]
  %v175 = vld [vmem:[%s3 + $0x30] sm:$0xff]
  %v176 = vld [vmem:[%s3 + $0x38] sm:$0xff]
  %v177 = vld [vmem:[%s3 + $0x40] sm:$0xff]
  %v178 = vld [vmem:[%s3 + $0x48] sm:$0xff]
  %v179 = vld [vmem:[%s3 + $0x50] sm:$0xff]
  %v180 = vld [vmem:[%s3 + $0x58] sm:$0xff]
  %v181 = vld [vmem:[%s3 + $0x60] sm:$0xff]
  %v182 = vld [vmem:[%s3 + $0x68] sm:$0xff]
  %v183 = vld [vmem:[%s3 + $0x70] sm:$0xff]
  %v184 = vld [vmem:[%s3 + $0x78] sm:$0xff]
  %v201 = vunpack.c.l.b16 %v169
  %v202 = vunpack.c.h.b16 %v169
  %v203 = vunpack.c.l.b16 %v170
  %v204 = vunpack.c.h.b16 %v170
  %v205 = vunpack.c.l.b16 %v171
  %v206 = vunpack.c.h.b16 %v171
  %v207 = vunpack.c.l.b16 %v172
  %v208 = vunpack.c.h.b16 %v172
  %v209 = vunpack.c.l.b16 %v173
  %v210 = vunpack.c.h.b16 %v173
  %v211 = vunpack.c.l.b16 %v174
  %v212 = vunpack.c.h.b16 %v174
  %v213 = vunpack.c.l.b16 %v175
  %v214 = vunpack.c.h.b16 %v175
  %v215 = vunpack.c.l.b16 %v176
  %v216 = vunpack.c.h.b16 %v176
  %v217 = vunpack.c.l.b16 %v177
  %v218 = vunpack.c.h.b16 %v177
  %v219 = vunpack.c.l.b16 %v178
  %v220 = vunpack.c.h.b16 %v178
  %v221 = vunpack.c.l.b16 %v179
  %v222 = vunpack.c.h.b16 %v179
  %v223 = vunpack.c.l.b16 %v180
  %v224 = vunpack.c.h.b16 %v180
  %v225 = vunpack.c.l.b16 %v181
  %v226 = vunpack.c.h.b16 %v181
  %v227 = vunpack.c.l.b16 %v182
  %v228 = vunpack.c.h.b16 %v182
  %v229 = vunpack.c.l.b16 %v183
  %v230 = vunpack.c.h.b16 %v183
  %v231 = vunpack.c.l.b16 %v184
  %v232 = vunpack.c.h.b16 %v184
  %v233 = vpack.c.b16 %v203, %v201
  %v234 = vpack.c.b16 %v204, %v202
  %v235 = vpack.c.b16 %v207, %v205
  %v236 = vpack.c.b16 %v208, %v206
  %v237 = vpack.c.b16 %v211, %v209
  %v238 = vpack.c.b16 %v212, %v210
  %v239 = vpack.c.b16 %v215, %v213
  %v240 = vpack.c.b16 %v216, %v214
  %v241 = vpack.c.b16 %v219, %v217
  %v242 = vpack.c.b16 %v220, %v218
  %v243 = vpack.c.b16 %v223, %v221
  %v244 = vpack.c.b16 %v224, %v222
  %v245 = vpack.c.b16 %v227, %v225
  %v246 = vpack.c.b16 %v228, %v226
  %v247 = vpack.c.b16 %v231, %v229
  %v248 = vpack.c.b16 %v232, %v230
  %265 = vmatpush.bf16.msra.mxu0 %v247
  %266 = vmatpush.bf16.msra.mxu0 %v245
  %267 = vmatpush.bf16.msra.mxu0 %v243
  %268 = vmatpush.bf16.msra.mxu0 %v241
  %269 = vmatpush.bf16.msra.mxu0 %v239
  %270 = vmatpush.bf16.msra.mxu0 %v237
  %271 = vmatpush.bf16.msra.mxu0 %v235
  %272 = vmatpush.bf16.msra.mxu0 %v233
  %273 = vmatmul.bf16.gmra.mxu0 %v168
  %v274 = vpop.f32.mrf.mxu0
  %v275 = vadd.f32 0.0, %v274
  %v276 = vpop.f32.mrf.mxu0
  %277 = vdwg.mxu0
  %278 = vmatpush.bf16.msra.mxu0 %v248
  %279 = vmatpush.bf16.msra.mxu0 %v246
  %280 = vmatpush.bf16.msra.mxu0 %v244
  %281 = vmatpush.bf16.msra.mxu0 %v242
  %282 = vmatpush.bf16.msra.mxu0 %v240
  %283 = vmatpush.bf16.msra.mxu0 %v238
  %284 = vmatpush.bf16.msra.mxu0 %v236
  %285 = vmatpush.bf16.msra.mxu0 %v234
  %286 = vmatmul.bf16.gmra.mxu0 %v168
  %v287 = vpop.f32.mrf.mxu0
  %v288 = vadd.f32 0.0, %v287
  %v289 = vpop.f32.mrf.mxu0
  %290 = vdwg.mxu0
  %v291 = vadd.f32 %v166, %v275
  %v292 = vadd.f32 %v167, %v288
  %v293 = vxor.u32 %v291, 2147483648
  %v294 = vmul.f32 %v293, 1.442695
  %v295 = vpow.pop %v294
  %v296 = vadd.f32 %v295, 1.0
  %v297 = vrcp.pop %v296
  %v298 = vmul.f32 %v296, %v297
  %v299 = vsub.f32 1.0, %v298
  %v300 = vmul.f32 %v297, %v299
  %v301 = vadd.f32 %v297, %v300
  %vm302 = vweird.f32 %v296
  %vm303 = vweird.f32 %v297
  %vm304 = vmor %vm302, %vm303
  %v305 = vsel %vm304, %v297, %v301
  %v306 = vand.u32 2147483647, %v296
  %vm307 = vcmp.eq.f32.partialorder %v306, 8.507059e+37
  %v308 = vand.u32 %v296, 2147483648
  %v309 = vor.u32 1.1754944e-38, %v308
  %v310 = vsel %vm307, %v309, %v305
  %v311 = vmul.f32 1.0, %v310
  %v312 = vtanh.pop %v292
  %v313 = vsub.f32 %v162, %v312
  %v314 = vmul.f32 %v311, %v313
  %v315 = vadd.f32 %v312, %v314
  %s316 = smul.u32 1, 2
  %s317 = smul.addr %s316, 8
  %s318 = scalar_lea.vmem [#allocation3], %s317
  %v319 = vld [vmem:[%s318] sm:$0xff]
  %v320 = vld [vmem:[%s318 + $0x8] sm:$0xff]
  %v321 = vpack.c.bf16 %v315, %v315
  %322 = vmatpush.bf16.msra.mxu0 %v247
  %323 = vmatpush.bf16.msra.mxu0 %v245
  %324 = vmatpush.bf16.msra.mxu0 %v243
  %325 = vmatpush.bf16.msra.mxu0 %v241
  %326 = vmatpush.bf16.msra.mxu0 %v239
  %327 = vmatpush.bf16.msra.mxu0 %v237
  %328 = vmatpush.bf16.msra.mxu0 %v235
  %329 = vmatpush.bf16.msra.mxu0 %v233
  %330 = vmatmul.bf16.gmra.mxu0 %v321
  %v331 = vpop.f32.mrf.mxu0
  %v332 = vadd.f32 0.0, %v331
  %v333 = vpop.f32.mrf.mxu0
  %334 = vdwg.mxu0
  %335 = vmatpush.bf16.msra.mxu0 %v248
  %336 = vmatpush.bf16.msra.mxu0 %v246
  %337 = vmatpush.bf16.msra.mxu0 %v244
  %338 = vmatpush.bf16.msra.mxu0 %v242
  %339 = vmatpush.bf16.msra.mxu0 %v240
  %340 = vmatpush.bf16.msra.mxu0 %v238
  %341 = vmatpush.bf16.msra.mxu0 %v236
  %342 = vmatpush.bf16.msra.mxu0 %v234
  %343 = vmatmul.bf16.gmra.mxu0 %v321
  %v344 = vpop.f32.mrf.mxu0
  %v345 = vadd.f32 0.0, %v344
  %v346 = vpop.f32.mrf.mxu0
  %347 = vdwg.mxu0
  %v348 = vadd.f32 %v319, %v332
  %v349 = vadd.f32 %v320, %v345
  %v350 = vxor.u32 %v348, 2147483648
  %v351 = vmul.f32 %v350, 1.442695
  %v352 = vpow.pop %v351
  %v353 = vadd.f32 %v352, 1.0
  %v354 = vrcp.pop %v353
  %v355 = vmul.f32 %v353, %v354
  %v356 = vsub.f32 1.0, %v355
  %v357 = vmul.f32 %v354, %v356
  %v358 = vadd.f32 %v354, %v357
  %vm359 = vweird.f32 %v353
  %vm360 = vweird.f32 %v354
  %vm361 = vmor %vm359, %vm360
  %v362 = vsel %vm361, %v354, %v358
  %v363 = vand.u32 2147483647, %v353
  %vm364 = vcmp.eq.f32.partialorder %v363, 8.507059e+37
  %v365 = vand.u32 %v353, 2147483648
  %v366 = vor.u32 1.1754944e-38, %v365
  %v367 = vsel %vm364, %v366, %v362
  %v368 = vmul.f32 1.0, %v367
  %v369 = vtanh.pop %v349
  %v370 = vsub.f32 %v315, %v369
  %v371 = vmul.f32 %v368, %v370
  %v372 = vadd.f32 %v369, %v371
  %s373 = smul.u32 2, 2
  %s374 = smul.addr %s373, 8
  %s375 = scalar_lea.vmem [#allocation3], %s374
  %v376 = vld [vmem:[%s375] sm:$0xff]
  %v377 = vld [vmem:[%s375 + $0x8] sm:$0xff]
  %v378 = vpack.c.bf16 %v372, %v372
  %379 = vmatpush.bf16.msra.mxu0 %v247
  %380 = vmatpush.bf16.msra.mxu0 %v245
  %381 = vmatpush.bf16.msra.mxu0 %v243
  %382 = vmatpush.bf16.msra.mxu0 %v241
  %383 = vmatpush.bf16.msra.mxu0 %v239
  %384 = vmatpush.bf16.msra.mxu0 %v237
  %385 = vmatpush.bf16.msra.mxu0 %v235
  %386 = vmatpush.bf16.msra.mxu0 %v233
  %387 = vmatmul.bf16.gmra.mxu0 %v378
  %v388 = vpop.f32.mrf.mxu0
  %v389 = vadd.f32 0.0, %v388
  %v390 = vpop.f32.mrf.mxu0
  %391 = vdwg.mxu0
  %392 = vmatpush.bf16.msra.mxu0 %v248
  %393 = vmatpush.bf16.msra.mxu0 %v246
  %394 = vmatpush.bf16.msra.mxu0 %v244
  %395 = vmatpush.bf16.msra.mxu0 %v242
  %396 = vmatpush.bf16.msra.mxu0 %v240
  %397 = vmatpush.bf16.msra.mxu0 %v238
  %398 = vmatpush.bf16.msra.mxu0 %v236
  %399 = vmatpush.bf16.msra.mxu0 %v234
  %400 = vmatmul.bf16.gmra.mxu0 %v378
  %v401 = vpop.f32.mrf.mxu0
  %v402 = vadd.f32 0.0, %v401
  %v403 = vpop.f32.mrf.mxu0
  %404 = vdwg.mxu0
  %v405 = vadd.f32 %v376, %v389
  %v406 = vadd.f32 %v377, %v402
  %v407 = vxor.u32 %v405, 2147483648
  %v408 = vmul.f32 %v407, 1.442695
  %v409 = vpow.pop %v408
  %v410 = vadd.f32 %v409, 1.0
  %v411 = vrcp.pop %v410
  %v412 = vmul.f32 %v410, %v411
  %v413 = vsub.f32 1.0, %v412
  %v414 = vmul.f32 %v411, %v413
  %v415 = vadd.f32 %v411, %v414
  %vm416 = vweird.f32 %v410
  %vm417 = vweird.f32 %v411
  %vm418 = vmor %vm416, %vm417
  %v419 = vsel %vm418, %v411, %v415
  %v420 = vand.u32 2147483647, %v410
  %vm421 = vcmp.eq.f32.partialorder %v420, 8.507059e+37
  %v422 = vand.u32 %v410, 2147483648
  %v423 = vor.u32 1.1754944e-38, %v422
  %v424 = vsel %vm421, %v423, %v419
  %v425 = vmul.f32 1.0, %v424
  %v426 = vtanh.pop %v406
  %v427 = vsub.f32 %v372, %v426
  %v428 = vmul.f32 %v425, %v427
  %v429 = vadd.f32 %v426, %v428
  %s430 = smul.u32 3, 2
  %s431 = smul.addr %s430, 8
  %s432 = scalar_lea.vmem [#allocation3], %s431
  %v433 = vld [vmem:[%s432] sm:$0xff]
  %v434 = vld [vmem:[%s432 + $0x8] sm:$0xff]
  %v435 = vpack.c.bf16 %v429, %v429
  %436 = vmatpush.bf16.msra.mxu0 %v247
  %437 = vmatpush.bf16.msra.mxu0 %v245
  %438 = vmatpush.bf16.msra.mxu0 %v243
  %439 = vmatpush.bf16.msra.mxu0 %v241
  %440 = vmatpush.bf16.msra.mxu0 %v239
  %441 = vmatpush.bf16.msra.mxu0 %v237
  %442 = vmatpush.bf16.msra.mxu0 %v235
  %443 = vmatpush.bf16.msra.mxu0 %v233
  %444 = vmatmul.bf16.gmra.mxu0 %v435
  %v445 = vpop.f32.mrf.mxu0
  %v446 = vadd.f32 0.0, %v445
  %v447 = vpop.f32.mrf.mxu0
  %448 = vdwg.mxu0
  %449 = vmatpush.bf16.msra.mxu0 %v248
  %450 = vmatpush.bf16.msra.mxu0 %v246
  %451 = vmatpush.bf16.msra.mxu0 %v244
  %452 = vmatpush.bf16.msra.mxu0 %v242
  %453 = vmatpush.bf16.msra.mxu0 %v240
  %454 = vmatpush.bf16.msra.mxu0 %v238
  %455 = vmatpush.bf16.msra.mxu0 %v236
  %456 = vmatpush.bf16.msra.mxu0 %v234
  %457 = vmatmul.bf16.gmra.mxu0 %v435
  %v458 = vpop.f32.mrf.mxu0
  %v459 = vadd.f32 0.0, %v458
  %v460 = vpop.f32.mrf.mxu0
  %461 = vdwg.mxu0
  %v462 = vadd.f32 %v433, %v446
  %v463 = vadd.f32 %v434, %v459
  %v464 = vxor.u32 %v462, 2147483648
  %v465 = vmul.f32 %v464, 1.442695
  %v466 = vpow.pop %v465
  %v467 = vadd.f32 %v466, 1.0
  %v468 = vrcp.pop %v467
  %v469 = vmul.f32 %v467, %v468
  %v470 = vsub.f32 1.0, %v469
  %v471 = vmul.f32 %v468, %v470
  %v472 = vadd.f32 %v468, %v471
  %vm473 = vweird.f32 %v467
  %vm474 = vweird.f32 %v468
  %vm475 = vmor %vm473, %vm474
  %v476 = vsel %vm475, %v468, %v472
  %v477 = vand.u32 2147483647, %v467
  %vm478 = vcmp.eq.f32.partialorder %v477, 8.507059e+37
  %v479 = vand.u32 %v467, 2147483648
  %v480 = vor.u32 1.1754944e-38, %v479
  %v481 = vsel %vm478, %v480, %v476
  %v482 = vmul.f32 1.0, %v481
  %v483 = vtanh.pop %v463
  %v484 = vsub.f32 %v429, %v483
  %v485 = vmul.f32 %v482, %v484
  %v486 = vadd.f32 %v483, %v485
  %s487 = smul.u32 4, 2
  %s488 = smul.addr %s487, 8
  %s489 = scalar_lea.vmem [#allocation3], %s488
  %v490 = vld [vmem:[%s489] sm:$0xff]
  %v491 = vld [vmem:[%s489 + $0x8] sm:$0xff]
  %v492 = vpack.c.bf16 %v486, %v486
  %493 = vmatpush.bf16.msra.mxu0 %v247
  %494 = vmatpush.bf16.msra.mxu0 %v245
  %495 = vmatpush.bf16.msra.mxu0 %v243
  %496 = vmatpush.bf16.msra.mxu0 %v241
  %497 = vmatpush.bf16.msra.mxu0 %v239
  %498 = vmatpush.bf16.msra.mxu0 %v237
  %499 = vmatpush.bf16.msra.mxu0 %v235
  %500 = vmatpush.bf16.msra.mxu0 %v233
  %501 = vmatmul.bf16.gmra.mxu0 %v492
  %v502 = vpop.f32.mrf.mxu0
  %v503 = vadd.f32 0.0, %v502
  %v504 = vpop.f32.mrf.mxu0
  %505 = vdwg.mxu0
  %506 = vmatpush.bf16.msra.mxu0 %v248
  %507 = vmatpush.bf16.msra.mxu0 %v246
  %508 = vmatpush.bf16.msra.mxu0 %v244
  %509 = vmatpush.bf16.msra.mxu0 %v242
  %510 = vmatpush.bf16.msra.mxu0 %v240
  %511 = vmatpush.bf16.msra.mxu0 %v238
  %512 = vmatpush.bf16.msra.mxu0 %v236
  %513 = vmatpush.bf16.msra.mxu0 %v234
  %514 = vmatmul.bf16.gmra.mxu0 %v492
  %v515 = vpop.f32.mrf.mxu0
  %v516 = vadd.f32 0.0, %v515
  %v517 = vpop.f32.mrf.mxu0
  %518 = vdwg.mxu0
  %v519 = vadd.f32 %v490, %v503
  %v520 = vadd.f32 %v491, %v516
  %v521 = vxor.u32 %v519, 2147483648
  %v522 = vmul.f32 %v521, 1.442695
  %v523 = vpow.pop %v522
  %v524 = vadd.f32 %v523, 1.0
  %v525 = vrcp.pop %v524
  %v526 = vmul.f32 %v524, %v525
  %v527 = vsub.f32 1.0, %v526
  %v528 = vmul.f32 %v525, %v527
  %v529 = vadd.f32 %v525, %v528
  %vm530 = vweird.f32 %v524
  %vm531 = vweird.f32 %v525
  %vm532 = vmor %vm530, %vm531
  %v533 = vsel %vm532, %v525, %v529
  %v534 = vand.u32 2147483647, %v524
  %vm535 = vcmp.eq.f32.partialorder %v534, 8.507059e+37
  %v536 = vand.u32 %v524, 2147483648
  %v537 = vor.u32 1.1754944e-38, %v536
  %v538 = vsel %vm535, %v537, %v533
  %v539 = vmul.f32 1.0, %v538
  %v540 = vtanh.pop %v520
  %v541 = vsub.f32 %v486, %v540
  %v542 = vmul.f32 %v539, %v541
  %v543 = vadd.f32 %v540, %v542
  %s544 = smul.u32 5, 2
  %s545 = smul.addr %s544, 8
  %s546 = scalar_lea.vmem [#allocation3], %s545
  %v547 = vld [vmem:[%s546] sm:$0xff]
  %v548 = vld [vmem:[%s546 + $0x8] sm:$0xff]
  %v549 = vpack.c.bf16 %v543, %v543
  %550 = vmatpush.bf16.msra.mxu0 %v247
  %551 = vmatpush.bf16.msra.mxu0 %v245
  %552 = vmatpush.bf16.msra.mxu0 %v243
  %553 = vmatpush.bf16.msra.mxu0 %v241
  %554 = vmatpush.bf16.msra.mxu0 %v239
  %555 = vmatpush.bf16.msra.mxu0 %v237
  %556 = vmatpush.bf16.msra.mxu0 %v235
  %557 = vmatpush.bf16.msra.mxu0 %v233
  %558 = vmatmul.bf16.gmra.mxu0 %v549
  %v559 = vpop.f32.mrf.mxu0
  %v560 = vadd.f32 0.0, %v559
  %v561 = vpop.f32.mrf.mxu0
  %562 = vdwg.mxu0
  %563 = vmatpush.bf16.msra.mxu0 %v248
  %564 = vmatpush.bf16.msra.mxu0 %v246
  %565 = vmatpush.bf16.msra.mxu0 %v244
  %566 = vmatpush.bf16.msra.mxu0 %v242
  %567 = vmatpush.bf16.msra.mxu0 %v240
  %568 = vmatpush.bf16.msra.mxu0 %v238
  %569 = vmatpush.bf16.msra.mxu0 %v236
  %570 = vmatpush.bf16.msra.mxu0 %v234
  %571 = vmatmul.bf16.gmra.mxu0 %v549
  %v572 = vpop.f32.mrf.mxu0
  %v573 = vadd.f32 0.0, %v572
  %v574 = vpop.f32.mrf.mxu0
  %575 = vdwg.mxu0
  %v576 = vadd.f32 %v547, %v560
  %v577 = vadd.f32 %v548, %v573
  %v578 = vxor.u32 %v576, 2147483648
  %v579 = vmul.f32 %v578, 1.442695
  %v580 = vpow.pop %v579
  %v581 = vadd.f32 %v580, 1.0
  %v582 = vrcp.pop %v581
  %v583 = vmul.f32 %v581, %v582
  %v584 = vsub.f32 1.0, %v583
  %v585 = vmul.f32 %v582, %v584
  %v586 = vadd.f32 %v582, %v585
  %vm587 = vweird.f32 %v581
  %vm588 = vweird.f32 %v582
  %vm589 = vmor %vm587, %vm588
  %v590 = vsel %vm589, %v582, %v586
  %v591 = vand.u32 2147483647, %v581
  %vm592 = vcmp.eq.f32.partialorder %v591, 8.507059e+37
  %v593 = vand.u32 %v581, 2147483648
  %v594 = vor.u32 1.1754944e-38, %v593
  %v595 = vsel %vm592, %v594, %v590
  %v596 = vmul.f32 1.0, %v595
  %v597 = vtanh.pop %v577
  %v598 = vsub.f32 %v543, %v597
  %v599 = vmul.f32 %v596, %v598
  %v600 = vadd.f32 %v597, %v599
  %s601 = smul.u32 6, 2
  %s602 = smul.addr %s601, 8
  %s603 = scalar_lea.vmem [#allocation3], %s602
  %v604 = vld [vmem:[%s603] sm:$0xff]
  %v605 = vld [vmem:[%s603 + $0x8] sm:$0xff]
  %v606 = vpack.c.bf16 %v600, %v600
  %607 = vmatpush.bf16.msra.mxu0 %v247
  %608 = vmatpush.bf16.msra.mxu0 %v245
  %609 = vmatpush.bf16.msra.mxu0 %v243
  %610 = vmatpush.bf16.msra.mxu0 %v241
  %611 = vmatpush.bf16.msra.mxu0 %v239
  %612 = vmatpush.bf16.msra.mxu0 %v237
  %613 = vmatpush.bf16.msra.mxu0 %v235
  %614 = vmatpush.bf16.msra.mxu0 %v233
  %615 = vmatmul.bf16.gmra.mxu0 %v606
  %v616 = vpop.f32.mrf.mxu0
  %v617 = vadd.f32 0.0, %v616
  %v618 = vpop.f32.mrf.mxu0
  %619 = vdwg.mxu0
  %620 = vmatpush.bf16.msra.mxu0 %v248
  %621 = vmatpush.bf16.msra.mxu0 %v246
  %622 = vmatpush.bf16.msra.mxu0 %v244
  %623 = vmatpush.bf16.msra.mxu0 %v242
  %624 = vmatpush.bf16.msra.mxu0 %v240
  %625 = vmatpush.bf16.msra.mxu0 %v238
  %626 = vmatpush.bf16.msra.mxu0 %v236
  %627 = vmatpush.bf16.msra.mxu0 %v234
  %628 = vmatmul.bf16.gmra.mxu0 %v606
  %v629 = vpop.f32.mrf.mxu0
  %v630 = vadd.f32 0.0, %v629
  %v631 = vpop.f32.mrf.mxu0
  %632 = vdwg.mxu0
  %v633 = vadd.f32 %v604, %v617
  %v634 = vadd.f32 %v605, %v630
  %v635 = vxor.u32 %v633, 2147483648
  %v636 = vmul.f32 %v635, 1.442695
  %v637 = vpow.pop %v636
  %v638 = vadd.f32 %v637, 1.0
  %v639 = vrcp.pop %v638
  %v640 = vmul.f32 %v638, %v639
  %v641 = vsub.f32 1.0, %v640
  %v642 = vmul.f32 %v639, %v641
  %v643 = vadd.f32 %v639, %v642
  %vm644 = vweird.f32 %v638
  %vm645 = vweird.f32 %v639
  %vm646 = vmor %vm644, %vm645
  %v647 = vsel %vm646, %v639, %v643
  %v648 = vand.u32 2147483647, %v638
  %vm649 = vcmp.eq.f32.partialorder %v648, 8.507059e+37
  %v650 = vand.u32 %v638, 2147483648
  %v651 = vor.u32 1.1754944e-38, %v650
  %v652 = vsel %vm649, %v651, %v647
  %v653 = vmul.f32 1.0, %v652
  %v654 = vtanh.pop %v634
  %v655 = vsub.f32 %v600, %v654
  %v656 = vmul.f32 %v653, %v655
  %v657 = vadd.f32 %v654, %v656
  %s658 = smul.u32 7, 2
  %s659 = smul.addr %s658, 8
  %s660 = scalar_lea.vmem [#allocation3], %s659
  %v661 = vld [vmem:[%s660] sm:$0xff]
  %v662 = vld [vmem:[%s660 + $0x8] sm:$0xff]
  %v663 = vpack.c.bf16 %v657, %v657
  %664 = vmatpush.bf16.msra.mxu0 %v247
  %665 = vmatpush.bf16.msra.mxu0 %v245
  %666 = vmatpush.bf16.msra.mxu0 %v243
  %667 = vmatpush.bf16.msra.mxu0 %v241
  %668 = vmatpush.bf16.msra.mxu0 %v239
  %669 = vmatpush.bf16.msra.mxu0 %v237
  %670 = vmatpush.bf16.msra.mxu0 %v235
  %671 = vmatpush.bf16.msra.mxu0 %v233
  %672 = vmatmul.bf16.gmra.mxu0 %v663
  %v673 = vpop.f32.mrf.mxu0
  %v674 = vadd.f32 0.0, %v673
  %v675 = vpop.f32.mrf.mxu0
  %676 = vdwg.mxu0
  %677 = vmatpush.bf16.msra.mxu0 %v248
  %678 = vmatpush.bf16.msra.mxu0 %v246
  %679 = vmatpush.bf16.msra.mxu0 %v244
  %680 = vmatpush.bf16.msra.mxu0 %v242
  %681 = vmatpush.bf16.msra.mxu0 %v240
  %682 = vmatpush.bf16.msra.mxu0 %v238
  %683 = vmatpush.bf16.msra.mxu0 %v236
  %684 = vmatpush.bf16.msra.mxu0 %v234
  %685 = vmatmul.bf16.gmra.mxu0 %v663
  %v686 = vpop.f32.mrf.mxu0
  %v687 = vadd.f32 0.0, %v686
  %v688 = vpop.f32.mrf.mxu0
  %689 = vdwg.mxu0
  %v690 = vadd.f32 %v661, %v674
  %v691 = vadd.f32 %v662, %v687
  %v692 = vxor.u32 %v690, 2147483648
  %v693 = vmul.f32 %v692, 1.442695
  %v694 = vpow.pop %v693
  %v695 = vadd.f32 %v694, 1.0
  %v696 = vrcp.pop %v695
  %v697 = vmul.f32 %v695, %v696
  %v698 = vsub.f32 1.0, %v697
  %v699 = vmul.f32 %v696, %v698
  %v700 = vadd.f32 %v696, %v699
  %vm701 = vweird.f32 %v695
  %vm702 = vweird.f32 %v696
  %vm703 = vmor %vm701, %vm702
  %v704 = vsel %vm703, %v696, %v700
  %v705 = vand.u32 2147483647, %v695
  %vm706 = vcmp.eq.f32.partialorder %v705, 8.507059e+37
  %v707 = vand.u32 %v695, 2147483648
  %v708 = vor.u32 1.1754944e-38, %v707
  %v709 = vsel %vm706, %v708, %v704
  %v710 = vmul.f32 1.0, %v709
  %v711 = vtanh.pop %v691
  %v712 = vsub.f32 %v657, %v711
  %v713 = vmul.f32 %v710, %v712
  %v714 = vadd.f32 %v711, %v713
  %715 = vst [vmem:[#allocation2] sm:$0xff] %v714
  // Predicated region
  $region30: #{custom_rnn_forward.1} parent=0 // pred_check
    %p716 = pneg %p24
  $region31: #{custom_rnn_forward.1} parent=0 // pred_check_branch
    %718 = sbr.rel (%p716) target = $region33
  $region32: #{custom_rnn_forward.1} parent=0 // pred_region
    %v719 = vld [vmem:[#allocation2] sm:$0xff]
    %v720 = vpack.c.bf16 %v719, %v719
    %v721 = vld [vmem:[%s4] sm:$0xf]
    %v722 = vld [vmem:[%s4 + $0x4] sm:$0xf]
    %v723 = vld [vmem:[%s4 + $0x8] sm:$0xf]
    %v724 = vld [vmem:[%s4 + $0xc] sm:$0xf]
    %v725 = vld [vmem:[%s4 + $0x10] sm:$0xf]
    %v726 = vld [vmem:[%s4 + $0x14] sm:$0xf]
    %v727 = vld [vmem:[%s4 + $0x18] sm:$0xf]
    %v728 = vld [vmem:[%s4 + $0x1c] sm:$0xf]
    %v729 = vld [vmem:[%s4 + $0x20] sm:$0xf]
    %v730 = vld [vmem:[%s4 + $0x24] sm:$0xf]
    %v731 = vld [vmem:[%s4 + $0x28] sm:$0xf]
    %v732 = vld [vmem:[%s4 + $0x2c] sm:$0xf]
    %v733 = vld [vmem:[%s4 + $0x30] sm:$0xf]
    %v734 = vld [vmem:[%s4 + $0x34] sm:$0xf]
    %v735 = vld [vmem:[%s4 + $0x38] sm:$0xf]
    %v736 = vld [vmem:[%s4 + $0x3c] sm:$0xf]
    %v737 = vld [vmem:[%s5] sm:$0x1]
    %v739 = vperm.slane %v737, 0
    %v757 = vunpack.c.l.b16 %v721
    %v758 = vunpack.c.l.b16 %v722
    %v759 = vunpack.c.l.b16 %v723
    %v760 = vunpack.c.l.b16 %v724
    %v761 = vunpack.c.l.b16 %v725
    %v762 = vunpack.c.l.b16 %v726
    %v763 = vunpack.c.l.b16 %v727
    %v764 = vunpack.c.l.b16 %v728
    %v765 = vunpack.c.l.b16 %v729
    %v766 = vunpack.c.l.b16 %v730
    %v767 = vunpack.c.l.b16 %v731
    %v768 = vunpack.c.l.b16 %v732
    %v769 = vunpack.c.l.b16 %v733
    %v770 = vunpack.c.l.b16 %v734
    %v771 = vunpack.c.l.b16 %v735
    %v772 = vunpack.c.l.b16 %v736
    %v773 = vpack.c.b16 %v758, %v757
    %v774 = vpack.c.b16 %v760, %v759
    %v775 = vpack.c.b16 %v762, %v761
    %v776 = vpack.c.b16 %v764, %v763
    %v777 = vpack.c.b16 %v766, %v765
    %v778 = vpack.c.b16 %v768, %v767
    %v779 = vpack.c.b16 %v770, %v769
    %v780 = vpack.c.b16 %v772, %v771
    %789 = vmatpush.bf16.msra.mxu0 %v780
    %790 = vmatpush.bf16.msra.mxu0 %v779
    %791 = vmatpush.bf16.msra.mxu0 %v778
    %792 = vmatpush.bf16.msra.mxu0 %v777
    %793 = vmatpush.bf16.msra.mxu0 %v776
    %794 = vmatpush.bf16.msra.mxu0 %v775
    %795 = vmatpush.bf16.msra.mxu0 %v774
    %796 = vmatpush.bf16.msra.mxu0 %v773
    %797 = vmatmul.bf16.gmra.mxu0 %v720
    %v798 = vpop.f32.mrf.mxu0
    %v799 = vadd.f32 %v739, %v798
    %v800 = vpop.f32.mrf.mxu0
    %801 = vdwg.mxu0
    %802 = vst [vmem:[%s6] sm:$0xff] %v799
  $region33: #{custom_rnn_forward.1} parent=0 // pred_fallthru
    _
  // Predicated region
  $region34: #{custom_rnn_forward.1} parent=0 // pred_check
    _
  $region35: #{custom_rnn_forward.1} parent=0 // pred_check_branch
    %804 = sbr.rel (0) target = $region37
  $region36: #{custom_rnn_forward.1} parent=0 // pred_region
    _
  $region37: #{custom_rnn_forward.1} parent=0 // pred_fallthru
    _
  // Predicated region
  $region38: #{custom_rnn_forward.1} parent=0 // pred_check
    _
  $region39: #{custom_rnn_forward.1} parent=0 // pred_check_branch
    %806 = sbr.rel (0) target = $region41
  $region40: #{custom_rnn_forward.1} parent=0 // pred_region
    _
  $region41: #{custom_rnn_forward.1} parent=0 // pred_fallthru
    _

</llo_original>
